<compile_context>
chip_gen: v7x
topology: tpu7x:2x2x1
jax: 0.10.0
libtpu: 0.0.40
codegen_flags: <defaults>
</compile_context>

<pallas_src>
import functools

import jax
import jax.numpy as jnp
from jax.experimental import pallas as pl
from jax.experimental.pallas import tpu as pltpu


def _rcfd_kernel(temp_ref, s_ref, t_ref, out_ref, *, batch, tile_b, need_mask):
    # Scalar 1/temp once -> a single scalar recip + one VPU multiply fused with
    # the cast, instead of a broadcast divide over the whole [tile_b, D] tile.
    inv_temp = 1.0 / temp_ref[0]

    s = s_ref[...].astype(jnp.float32) * inv_temp
    t = t_ref[...].astype(jnp.float32)

    # Student: only the shifted logits and the row log-partition are needed.
    s_shift = s - jnp.max(s, axis=-1, keepdims=True)
    log_z_s = jnp.log(jnp.sum(jnp.exp(s_shift), axis=-1, keepdims=True))  # [tile_b,1]

    # Teacher: exp + row-sum (no p / log_p tiles).
    t_shift = t - jnp.max(t, axis=-1, keepdims=True)
    t_exp = jnp.exp(t_shift)
    t_sum = jnp.sum(t_exp, axis=-1, keepdims=True)                        # [tile_b,1]

    # Fused per-row KL(p || q):
    #   KL = sum_d t_exp*(t_shift - s_shift) / t_sum + logZ_s - log(t_sum)
    # (log_q never materialized as a [tile_b, D] tile).
    fused = jnp.sum(t_exp * (t_shift - s_shift), axis=-1, keepdims=True)
    kl_row = fused / t_sum + log_z_s - jnp.log(t_sum)                     # [tile_b,1]

    if need_mask:
        # Last tile may be padded with garbage rows; discard them (value-level
        # select, so inf/NaN from garbage never reaches the block sum).
        row0 = pl.program_id(0) * tile_b
        row_ids = row0 + jax.lax.broadcasted_iota(jnp.int32, (tile_b, 1), 0)
        kl_row = jnp.where(row_ids < batch, kl_row, 0.0)

    # Lane-dense per-block partial sum (unmasked vst); reduced in the wrapper.
    partial = jnp.sum(kl_row)
    out_ref[...] = jnp.full(out_ref.shape, partial, dtype=jnp.float32)


def _vmem_capacity_bytes():
    try:
        return int(pltpu.get_tpu_info().vmem_capacity_bytes)
    except Exception:
        return 128 * 1024 * 1024  # v5e/v6e default


def _pick_tile_b(batch, d, in_itemsize, vmem_limit_bytes):
    """Largest batch tile fitting ~half the VMEM limit; >=2 blocks when possible.

    Working set per row: 2 inputs x 2 pipeline buffers x D x itemsize
    (BlockSpec double buffering) + ~5 live f32 [tile_b, D] temporaries in the
    kernel body (post log_q fusion).
    """
    per_row = 2 * 2 * d * in_itemsize + 5 * d * 4
    budget = vmem_limit_bytes // 2
    # Sublane packing multiple: 8 for f32, 16 for bf16, 32 for int8/fp8.
    sublane = max(8, 32 // max(in_itemsize, 1))
    max_rows = budget // max(per_row, 1)
    if max_rows < sublane:
        # TODO(synk): D-tiled online-softmax path for very wide feature dims.
        raise ValueError(
            f"feature dim D={d} is too wide for a single row-tile within "
            f"{vmem_limit_bytes // (1 << 20)} MiB VMEM; a D-tiled path is needed.")
    if batch > sublane:
        # Keep at least 2 grid blocks so both v7x TensorCores get work.
        two_block = ((-(-batch // 2)) + sublane - 1) // sublane * sublane
        max_rows = min(max_rows, two_block)
    tile = min(max_rows, batch, 2048)
    tile = max(sublane, (tile // sublane) * sublane)
    if tile >= batch:
        return batch          # single block == full batch dim (always legal)
    return tile


def rcfd_loss(s_feats, t_feats, temp, *, tile_b=None):
    """Pallas RCFD loss. s_feats, t_feats: [B, D] (f32 or bf16). temp: scalar.

    On v5e/v6e the kernel is HBM-bandwidth bound with f32 inputs; pass bf16
    features from the caller when possible (compute stays f32 in-kernel).
    """
    assert s_feats.ndim == 2 and s_feats.shape == t_feats.shape
    batch, d = s_feats.shape
    in_itemsize = jnp.dtype(s_feats.dtype).itemsize

    # Generation-aware VMEM sizing (v7x: 64 MiB/TC, v5e/v6e: 128 MiB).
    vmem_cap = _vmem_capacity_bytes()
    vmem_limit = min(int(0.6 * vmem_cap), 96 * 1024 * 1024)

    if tile_b is None:
        tile_b = _pick_tile_b(batch, d, in_itemsize, vmem_limit)
    num_blocks = pl.cdiv(batch, tile_b)
    need_mask = (batch % tile_b) != 0     # compile-time specialization

    temp_arr = jnp.asarray(temp, dtype=jnp.float32).reshape(1)
    kernel = functools.partial(
        _rcfd_kernel, batch=batch, tile_b=tile_b, need_mask=need_mask)

    cost = pl.CostEstimate(
        flops=9 * batch * d,
        transcendentals=2 * batch * d + 3 * batch,
        bytes_accessed=2 * batch * d * in_itemsize + num_blocks * 8 * 128 * 4,
    )

    partials = pl.pallas_call(
        kernel,
        out_shape=jax.ShapeDtypeStruct((num_blocks * 8, 128), jnp.float32),
        grid=(num_blocks,),
        in_specs=[
            pl.BlockSpec(memory_space=pltpu.SMEM),          # temp scalar (resident)
            pl.BlockSpec((tile_b, d), lambda i: (i, 0)),    # student tile
            pl.BlockSpec((tile_b, d), lambda i: (i, 0)),    # teacher tile
        ],
        out_specs=pl.BlockSpec((8, 128), lambda i: (i, 0)),  # per-block partial sums
        compiler_params=pltpu.CompilerParams(
            dimension_semantics=("parallel",),
            vmem_limit_bytes=vmem_limit,
        ),
        cost_estimate=cost,
    )(temp_arr, s_feats, t_feats)

    # reduction='batchmean': global KL sum divided by the batch size.
    return jnp.sum(partials[::8, 0]) / jnp.float32(batch)


def rcfd_reference(s_feats, t_feats, temp):
    """Pure-JAX reference for checking."""
    s = s_feats.astype(jnp.float32)
    t = t_feats.astype(jnp.float32)
    log_q = jax.nn.log_softmax(s / temp, axis=-1)
    p = jax.nn.softmax(t, axis=-1)
    log_p = jax.nn.log_softmax(t, axis=-1)
    return jnp.sum(p * (log_p - log_q)) / s_feats.shape[0]


if __name__ == "__main__":
    key = jax.random.PRNGKey(0)
    k1, k2, k3, k4, k5, k6 = jax.random.split(key, 6)

    # nn.Parameter(torch.tensor(1.0)) -> deterministic init temp = 1.0
    temp1 = jnp.float32(1.0)

    # Case 1: explicit small tile, batch a multiple of the tile
    #         -> several pipelined grid steps, mask path compiled out.
    B1, D1 = 24, 256
    s1 = jax.random.normal(k1, (B1, D1), dtype=jnp.float32)
    t1 = jax.random.normal(k2, (B1, D1), dtype=jnp.float32)
    loss1 = rcfd_loss(s1, t1, temp1, tile_b=8)
    jax.block_until_ready(loss1)
    ref1 = rcfd_reference(s1, t1, temp1)
    assert jnp.allclose(loss1, ref1, atol=1e-5, rtol=1e-4), (loss1, ref1)

    # Case 2: auto tile, ragged batch, D not a multiple of 128 (lane padding),
    #         non-unit temperature -> exercises masking + auto tile picker.
    temp2 = jnp.float32(1.7)
    B2, D2 = 20, 300
    s2 = jax.random.normal(k3, (B2, D2), dtype=jnp.float32)
    t2 = jax.random.normal(k4, (B2, D2), dtype=jnp.float32)
    loss2 = rcfd_loss(s2, t2, temp2)
    jax.block_until_ready(loss2)
    ref2 = rcfd_reference(s2, t2, temp2)
    assert jnp.allclose(loss2, ref2, atol=1e-5, rtol=1e-4), (loss2, ref2)

    # Case 3: bf16 inputs (half the HBM traffic on v5e/v6e), auto tile rounds
    #         to the bf16 sublane packing of 16 and keeps 2 grid blocks.
    B3, D3 = 32, 384
    s3 = jax.random.normal(k5, (B3, D3), dtype=jnp.bfloat16)
    t3 = jax.random.normal(k6, (B3, D3), dtype=jnp.bfloat16)
    loss3 = rcfd_loss(s3, t3, temp1)
    jax.block_until_ready(loss3)
    ref3 = rcfd_reference(s3, t3, temp1)
    assert jnp.allclose(loss3, ref3, atol=1e-4, rtol=1e-3), (loss3, ref3)

    print("KERNEL_OK")
</pallas_src>

<mosaic_0001>
module attributes {stable_mosaic.version = 11 : i64} {
  func.func @_rcfd_kernel(%arg0: i32, %arg1: memref<1xf32, #tpu.memory_space<smem>>, %arg2: memref<8x256xf32, #tpu.memory_space<vmem>>, %arg3: memref<8x256xf32, #tpu.memory_space<vmem>>, %arg4: memref<8x128xf32, #tpu.memory_space<vmem>>) attributes {dimension_semantics = [#tpu.dimension_semantics<parallel>], iteration_bounds = array<i64: 3>, scalar_prefetch = 0 : i64, scratch_operands = 0 : i64, tpu.core_type = #tpu.core_type<tc>, window_params = [{transform_indices = @transform_0, window_bounds = array<i64: 1>}, {transform_indices = @transform_1, window_bounds = array<i64: 8, 256>}, {transform_indices = @transform_2, window_bounds = array<i64: 8, 256>}, {transform_indices = @transform_3, window_bounds = array<i64: 8, 128>}]} {
    %c0 = arith.constant 0 : index
    %0 = memref.load %arg1[%c0] : memref<1xf32, #tpu.memory_space<smem>>
    %cst = arith.constant 1.000000e+00 : f32
    %1 = arith.divf %cst, %0 : f32
    %c0_0 = arith.constant 0 : index
    %c0_1 = arith.constant 0 : index
    %2 = vector.load %arg2[%c0_0, %c0_1] : memref<8x256xf32, #tpu.memory_space<vmem>>, vector<8x256xf32>
    %3 = vector.broadcast %1 : f32 to vector<8x256xf32>
    %4 = arith.mulf %2, %3 : vector<8x256xf32>
    %c0_2 = arith.constant 0 : index
    %c0_3 = arith.constant 0 : index
    %5 = vector.load %arg3[%c0_2, %c0_3] : memref<8x256xf32, #tpu.memory_space<vmem>>, vector<8x256xf32>
    %cst_4 = arith.constant dense<0xFF800000> : vector<8xf32>
    %6 = vector.multi_reduction <maximumf>, %4, %cst_4 [1] : vector<8x256xf32> to vector<8xf32>
    %7 = vector.shape_cast %6 : vector<8xf32> to vector<8x1xf32>
    %8 = vector.broadcast %7 : vector<8x1xf32> to vector<8x256xf32>
    %9 = arith.subf %4, %8 : vector<8x256xf32>
    %10 = math.exp %9 : vector<8x256xf32>
    %cst_5 = arith.constant dense<0.000000e+00> : vector<8xf32>
    %11 = vector.multi_reduction <add>, %10, %cst_5 [1] : vector<8x256xf32> to vector<8xf32>
    %12 = vector.shape_cast %11 : vector<8xf32> to vector<8x1xf32>
    %13 = math.log %12 : vector<8x1xf32>
    %cst_6 = arith.constant dense<0xFF800000> : vector<8xf32>
    %14 = vector.multi_reduction <maximumf>, %5, %cst_6 [1] : vector<8x256xf32> to vector<8xf32>
    %15 = vector.shape_cast %14 : vector<8xf32> to vector<8x1xf32>
    %16 = vector.broadcast %15 : vector<8x1xf32> to vector<8x256xf32>
    %17 = arith.subf %5, %16 : vector<8x256xf32>
    %18 = math.exp %17 : vector<8x256xf32>
    %cst_7 = arith.constant dense<0.000000e+00> : vector<8xf32>
    %19 = vector.multi_reduction <add>, %18, %cst_7 [1] : vector<8x256xf32> to vector<8xf32>
    %20 = vector.shape_cast %19 : vector<8xf32> to vector<8x1xf32>
    %21 = arith.subf %17, %9 : vector<8x256xf32>
    %22 = arith.mulf %18, %21 : vector<8x256xf32>
    %cst_8 = arith.constant dense<0.000000e+00> : vector<8xf32>
    %23 = vector.multi_reduction <add>, %22, %cst_8 [1] : vector<8x256xf32> to vector<8xf32>
    %24 = vector.shape_cast %23 : vector<8xf32> to vector<8x1xf32>
    %25 = arith.divf %24, %20 : vector<8x1xf32>
    %26 = arith.addf %25, %13 : vector<8x1xf32>
    %27 = math.log %20 : vector<8x1xf32>
    %28 = arith.subf %26, %27 : vector<8x1xf32>
    %29 = vector.shape_cast %28 : vector<8x1xf32> to vector<1x8x1xf32>
    %cst_9 = arith.constant dense<0.000000e+00> : vector<1xf32>
    %30 = vector.multi_reduction <add>, %29, %cst_9 [1, 2] : vector<1x8x1xf32> to vector<1xf32>
    %31 = vector.shape_cast %30 : vector<1xf32> to vector<1x1x1xf32>
    %32 = vector.extract %31[0, 0, 0] : f32 from vector<1x1x1xf32>
    %33 = vector.broadcast %32 : f32 to vector<8x128xf32>
    %c0_10 = arith.constant 0 : index
    %c0_11 = arith.constant 0 : index
    %34 = vector.load %arg4[%c0_10, %c0_11] : memref<8x128xf32, #tpu.memory_space<vmem>>, vector<8x128xf32>
    tpu.vector_store %arg4[%c0_10, %c0_11], %33 {strides = array<i32>} : memref<8x128xf32, #tpu.memory_space<vmem>>, vector<8x128xf32>,
    return
  }
  func.func @transform_0(%arg0: i32) -> i32 {
    %c0_i32 = arith.constant 0 : i32
    %c0_i32_0 = arith.constant 0 : i32
    return %c0_i32 : i32
  }
  func.func @transform_1(%arg0: i32) -> (i32, i32) {
    %c0_i32 = arith.constant 0 : i32
    %c0_i32_0 = arith.constant 0 : i32
    return %arg0, %c0_i32 : i32, i32
  }
  func.func @transform_2(%arg0: i32) -> (i32, i32) {
    %c0_i32 = arith.constant 0 : i32
    %c0_i32_0 = arith.constant 0 : i32
    return %arg0, %c0_i32 : i32, i32
  }
  func.func @transform_3(%arg0: i32) -> (i32, i32) {
    %c0_i32 = arith.constant 0 : i32
    %c0_i32_0 = arith.constant 0 : i32
    return %arg0, %c0_i32 : i32, i32
  }
}

</mosaic_0001>

<llo_original>
// kernel: tpu_custom_call.1
$region0: #{tpu_custom_call.1}
  #allocation0 [shape = 'u32[]', space=smem, size = 0x4, offset = 0x4, fixed_abs, tag = 'smem constant byte address 0x4 - core index']
  #allocation1 [shape = 'u32[144,128]{1,0:T(1,128)}', space=vmem, size = 0x12000, scoped, tag = 'internal scratch']
  #allocation2 [shape = 'f32[1]{0:T(128)S(6)}', space=smem, size = 0x200, scoped, tag = 'scoped memory for tpu_custom_call.1']
  %s0 = inlined_call_operand.<no memory space> [shape: f32[1], index: 0, kind: input, shape index: {}]
  %s1 = inlined_call_operand.hbm [shape: f32[24,256], index: 1, kind: input, shape index: {}]
  %s2 = inlined_call_operand.hbm [shape: f32[24,256], index: 2, kind: input, shape index: {}]
  %s3 = inlined_call_operand.hbm [shape: f32[24,128], index: 3, kind: output, shape index: {}]
  %s4 = sld [smem:[#allocation0]]
  $region53: #{tpu_custom_call.1} parent=0
    _
  %s6 = ssub.s32 1, %s4
  %s7 = scalar_select 0, %s6, %s4
  %8 = sst [smem:[#allocation2]] %s0
  $region1: #{tpu_custom_call.1} parent=0
    #allocation3 [shape = 'u8[16384]{0}', space=vmem, size = 0x4000, scoped, tag = 'input window, operand 1']
    #allocation4 [shape = 's32[2]{0}', space=sflag, size = 0x8, scoped, tag = 'scoped memory for tpu_custom_call.1']
    #allocation5 [shape = 's32[2]{0}', space=sflag, size = 0x8, scoped, tag = 'scoped memory for tpu_custom_call.1']
    #allocation6 [shape = 'u8[16384]{0}', space=vmem, size = 0x4000, scoped, tag = 'input window, operand 2']
    #allocation7 [shape = 's32[2]{0}', space=sflag, size = 0x8, scoped, tag = 'scoped memory for tpu_custom_call.1']
    #allocation8 [shape = 'u8[8192]{0}', space=vmem, size = 0x2000, scoped, tag = 'output window, operand 0']
    %9 = vsyncpa [#allocation4], 0
    %s10 = scalar_lea.sflag [#allocation4], 1
    %11 = vsyncpa %s10, 0
    %12 = vsyncpa [#allocation7], 0
    %s13 = scalar_lea.sflag [#allocation7], 1
    %14 = vsyncpa %s13, 0
    %15 = vsyncpa [#allocation5], 0
    %s16 = scalar_lea.sflag [#allocation5], 1
    %17 = vsyncpa %s16, 0
    loop: start=0, step=1, limit=5
    $region2: #{tpu_custom_call.1} parent=1 // loop_pre_header
      _
    $region3: #{tpu_custom_call.1} parent=1 // loop_header
      %s19 = sphi 0, %s23
      %p20 = scmp.ge.s32.totalorder %s19, 5
      %s27 = sphi 0, %s27
      %s29 = sphi 0, %s27
      %s30 = sphi 0, %s29
      %s44 = sphi 0, %s30
      %s50 = sphi 0, %s52
      %s53 = sphi 0, %s50
      %s54 = sphi 0, %s53
      %s70 = sphi 0, %s54
      %s76 = sphi 0, %s78
      %s79 = sphi 0, %s76
      %s80 = sphi 0, %s79
      %s96 = sphi 0, %s80
      %s102 = sphi 0, %s104
      %s105 = sphi 0, %s102
      %s106 = sphi 0, %s105
      %s122 = sphi 0, %s106
    $region4: #{tpu_custom_call.1} parent=1 // loop_header_branch
      %22 = sbr.rel (%p20) target = $region8
    $region5: #{tpu_custom_call.1} parent=1 // loop_body
      %s24 = ssub.s32 %s19, 1
      %s25 = ssub.s32 %s19, 2
      %s26 = sadd.s32 %s19, 1
      %s28 = sadd.s32 %s27, 1
      %p31 = scmp.eq.s32.totalorder %s19, 2
      %p32 = scmp.ne.s32.totalorder %s27, %s29
      %p33 = scmp.eq.s32.totalorder %s19, 0
      %p34 = por %p32, %p33
      %p35 = scmp.ne.s32.totalorder %s27, %s29
      %p36 = scmp.eq.s32.totalorder %s24, 2
      %p37 = por %p35, %p36
      %p38 = scmp.ne.s32.totalorder %s29, %s30
      %p39 = scmp.eq.s32.totalorder %s24, 0
      %p40 = por %p38, %p39
      %p41 = scmp.ne.s32.totalorder %s29, %s30
      %p42 = scmp.eq.s32.totalorder %s25, 2
      %p43 = por %p41, %p42
      %p45 = scmp.ne.s32.totalorder %s30, %s44
      %p46 = scmp.eq.s32.totalorder %s25, 0
      %p47 = por %p45, %p46
      %s48 = ssub.s32 %s19, %s26
      %p49 = scmp.eq.s32.totalorder %s48, 0
      %s51 = sadd.s32 %s50, 1
      %s52 = scalar_select %p49, %s50, %s51
      %p55 = pneg %p49
      %p56 = scmp.eq.s32.totalorder %s19, 2
      %p57 = por %p55, %p56
      %p58 = scmp.ne.s32.totalorder %s50, %s53
      %p59 = scmp.eq.s32.totalorder %s19, 0
      %p60 = por %p58, %p59
      %p61 = scmp.ne.s32.totalorder %s50, %s53
      %p62 = scmp.eq.s32.totalorder %s24, 2
      %p63 = por %p61, %p62
      %p64 = scmp.ne.s32.totalorder %s53, %s54
      %p65 = scmp.eq.s32.totalorder %s24, 0
      %p66 = por %p64, %p65
      %p67 = scmp.ne.s32.totalorder %s53, %s54
      %p68 = scmp.eq.s32.totalorder %s25, 2
      %p69 = por %p67, %p68
      %p71 = scmp.ne.s32.totalorder %s54, %s70
      %p72 = scmp.eq.s32.totalorder %s25, 0
      %p73 = por %p71, %p72
      %s74 = ssub.s32 %s19, %s26
      %p75 = scmp.eq.s32.totalorder %s74, 0
      %s77 = sadd.s32 %s76, 1
      %s78 = scalar_select %p75, %s76, %s77
      %p81 = pneg %p75
      %p82 = scmp.eq.s32.totalorder %s19, 2
      %p83 = por %p81, %p82
      %p84 = scmp.ne.s32.totalorder %s76, %s79
      %p85 = scmp.eq.s32.totalorder %s19, 0
      %p86 = por %p84, %p85
      %p87 = scmp.ne.s32.totalorder %s76, %s79
      %p88 = scmp.eq.s32.totalorder %s24, 2
      %p89 = por %p87, %p88
      %p90 = scmp.ne.s32.totalorder %s79, %s80
      %p91 = scmp.eq.s32.totalorder %s24, 0
      %p92 = por %p90, %p91
      %p93 = scmp.ne.s32.totalorder %s79, %s80
      %p94 = scmp.eq.s32.totalorder %s25, 2
      %p95 = por %p93, %p94
      %p97 = scmp.ne.s32.totalorder %s80, %s96
      %p98 = scmp.eq.s32.totalorder %s25, 0
      %p99 = por %p97, %p98
      %s100 = ssub.s32 %s19, %s26
      %p101 = scmp.eq.s32.totalorder %s100, 0
      %s103 = sadd.s32 %s102, 1
      %s104 = scalar_select %p101, %s102, %s103
      %p107 = pneg %p101
      %p108 = scmp.eq.s32.totalorder %s19, 2
      %p109 = por %p107, %p108
      %p110 = scmp.ne.s32.totalorder %s102, %s105
      %p111 = scmp.eq.s32.totalorder %s19, 0
      %p112 = por %p110, %p111
      %p113 = scmp.ne.s32.totalorder %s102, %s105
      %p114 = scmp.eq.s32.totalorder %s24, 2
      %p115 = por %p113, %p114
      %p116 = scmp.ne.s32.totalorder %s105, %s106
      %p117 = scmp.eq.s32.totalorder %s24, 0
      %p118 = por %p116, %p117
      %p119 = scmp.ne.s32.totalorder %s105, %s106
      %p120 = scmp.eq.s32.totalorder %s25, 2
      %p121 = por %p119, %p120
      %p123 = scmp.ne.s32.totalorder %s106, %s122
      %p124 = scmp.eq.s32.totalorder %s25, 0
      %p125 = por %p123, %p124
      %p126 = scmp.le.s32.totalorder 1, %s19
      %p127 = scmp.lt.s32.totalorder %s19, 4
      %p128 = pnand %p126, %p127
      %p129 = pneg %p128
      // Predicated region
      $region9: #{tpu_custom_call.1} parent=5 // pred_check
        _
      $region10: #{tpu_custom_call.1} parent=5 // pred_check_branch
        %131 = sbr.rel (%p128) target = $region12
      $region11: #{tpu_custom_call.1} parent=5 // pred_region
        %s132 = ssub.s32 %s19, 1
        // Predicated region
        $region13: #{tpu_custom_call.1} parent=11 // pred_check
          %p133 = pneg %p40
        $region14: #{tpu_custom_call.1} parent=11 // pred_check_branch
          %135 = sbr.rel (%p133) target = $region16
        $region15: #{tpu_custom_call.1} parent=11 // pred_region
          _
        $region16: #{tpu_custom_call.1} parent=11 // pred_fallthru
          _
      $region12: #{tpu_custom_call.1} parent=5 // pred_fallthru
        _
      %p136 = scmp.lt.s32.totalorder %s19, 3
      // Predicated region
      $region17: #{tpu_custom_call.1} parent=5 // pred_check
        %p137 = pneg %p136
      $region18: #{tpu_custom_call.1} parent=5 // pred_check_branch
        %139 = sbr.rel (%p137) target = $region20
      $region19: #{tpu_custom_call.1} parent=5 // pred_region
        // Predicated region
        $region21: #{tpu_custom_call.1} parent=19 // pred_check
          %p140 = pneg %p60
        $region22: #{tpu_custom_call.1} parent=19 // pred_check_branch
          %142 = sbr.rel (%p140) target = $region24
        $region23: #{tpu_custom_call.1} parent=19 // pred_region
          %s143 = sand.u32 %s50, 1
          %s144 = scalar_lea.sflag [#allocation4], %s143
          %s145 = sand.u32 %s50, 1
          %s146 = smul.addr %s145, 16
          %s147 = scalar_lea.vmem [#allocation3], %s146
          %s149 = ssub.s32 256, 256
          %150 = vsyncadd %s144, %s149
          %s151 = smul.addr %s19, 2
          %s152 = smul.addr %s151, 128
          %s153 = scalar_lea.hbm %s1, %s152
          %s155 = sshll.u32 %s147, 4
          %s156 = int_to_ptr.vmem [resolvable:$true] %s155
          %158 = dma.hbm_to_vmem [thread:$0]  %s153, 256, %s156, %s144
        $region24: #{tpu_custom_call.1} parent=19 // pred_fallthru
          _
        // Predicated region
        $region25: #{tpu_custom_call.1} parent=19 // pred_check
          %p159 = pneg %p86
        $region26: #{tpu_custom_call.1} parent=19 // pred_check_branch
          %161 = sbr.rel (%p159) target = $region28
        $region27: #{tpu_custom_call.1} parent=19 // pred_region
          %s162 = sand.u32 %s76, 1
          %s163 = scalar_lea.sflag [#allocation7], %s162
          %s164 = sand.u32 %s76, 1
          %s165 = smul.addr %s164, 16
          %s166 = scalar_lea.vmem [#allocation6], %s165
          %s168 = ssub.s32 256, 256
          %169 = vsyncadd %s163, %s168
          %s170 = smul.addr %s19, 2
          %s171 = smul.addr %s170, 128
          %s172 = scalar_lea.hbm %s2, %s171
          %s174 = sshll.u32 %s166, 4
          %s175 = int_to_ptr.vmem [resolvable:$true] %s174
          %177 = dma.hbm_to_vmem [thread:$0]  %s172, 256, %s175, %s163
        $region28: #{tpu_custom_call.1} parent=19 // pred_fallthru
          _
      $region20: #{tpu_custom_call.1} parent=5 // pred_fallthru
        _
      %p178 = scmp.le.s32.totalorder 1, %s19
      %p179 = scmp.lt.s32.totalorder %s19, 4
      %p180 = pnand %p178, %p179
      %p181 = pneg %p180
      // Predicated region
      $region29: #{tpu_custom_call.1} parent=5 // pred_check
        _
      $region30: #{tpu_custom_call.1} parent=5 // pred_check_branch
        %183 = sbr.rel (%p180) target = $region32
      $region31: #{tpu_custom_call.1} parent=5 // pred_region
        %s184 = ssub.s32 %s19, 1
        %s185 = sand.u32 %s53, 1
        %s186 = scalar_lea.sflag [#allocation4], %s185
        %s187 = sand.u32 %s53, 1
        %s188 = smul.addr %s187, 16
        %s189 = scalar_lea.vmem [#allocation3], %s188
        // Predicated region
        $region33: #{tpu_custom_call.1} parent=31 // pred_check
          %p190 = pneg %p66
        $region34: #{tpu_custom_call.1} parent=31 // pred_check_branch
          %192 = sbr.rel (%p190) target = $region36
        $region35: #{tpu_custom_call.1} parent=31 // pred_region
          %193 = dma.done %s186, 256
        $region36: #{tpu_custom_call.1} parent=31 // pred_fallthru
          _
        %s194 = sand.u32 %s79, 1
        %s195 = scalar_lea.sflag [#allocation7], %s194
        %s196 = sand.u32 %s79, 1
        %s197 = smul.addr %s196, 16
        %s198 = scalar_lea.vmem [#allocation6], %s197
        // Predicated region
        $region37: #{tpu_custom_call.1} parent=31 // pred_check
          %p199 = pneg %p92
        $region38: #{tpu_custom_call.1} parent=31 // pred_check_branch
          %201 = sbr.rel (%p199) target = $region40
        $region39: #{tpu_custom_call.1} parent=31 // pred_region
          %202 = dma.done %s195, 256
        $region40: #{tpu_custom_call.1} parent=31 // pred_fallthru
          _
        %p203 = pneg %p40
        %p204 = pneg %p37
        %s205 = sand.u32 %s53, 1
        %s206 = scalar_lea.sflag [#allocation4], %s205
        %s207 = sand.u32 %s53, 1
        %s208 = smul.addr %s207, 16
        %s209 = scalar_lea.vmem [#allocation3], %s208
        %p210 = pneg %p66
        %p211 = pneg %p63
        %s212 = sand.u32 %s79, 1
        %s213 = scalar_lea.sflag [#allocation7], %s212
        %s214 = sand.u32 %s79, 1
        %s215 = smul.addr %s214, 16
        %s216 = scalar_lea.vmem [#allocation6], %s215
        %p217 = pneg %p92
        %p218 = pneg %p89
        %p219 = pneg %p118
        %p220 = pneg %p115
        %s221 = sand.u32 %s105, 1
        %s222 = scalar_lea.sflag [#allocation5], %s221
        %s223 = sand.u32 %s105, 1
        %s224 = smul.addr %s223, 8
        %s225 = scalar_lea.vmem [#allocation8], %s224
        %s226 = sld [smem:[#allocation2]]
        %v227 = vstv %s226
        %v228 = vrcp.pop %v227
        %s229 = vtos %v228
        %v230 = vld [vmem:[%s189] sm:$0xff]
        %v231 = vld [vmem:[%s189 + $0x8] sm:$0xff]
        %v232 = vstv %s229
        %v233 = vmul.f32 %v230, %v232
        %v234 = vmul.f32 %v231, %v232
        %v235 = vld [vmem:[%s198] sm:$0xff]
        %v236 = vld [vmem:[%s198 + $0x8] sm:$0xff]
        %v237 = vmax.f32 %v233, %v234
        %238 = vmax.xlane.f32.xlu0 %v237
        %v239 = vpop.xlane.xlu0 %238
        %v240 = vsub.f32 %v233, %v239
        %v241 = vsub.f32 %v234, %v239
        %v242 = vmul.f32 %v240, 1.442695
        %v243 = vpow.pop %v242
        %v244 = vmul.f32 %v241, 1.442695
        %v245 = vpow.pop %v244
        %v246 = vadd.f32 %v243, %v245
        %247 = vadd.xlane.f32.xlu0 %v246
        %v248 = vpop.xlane.xlu0 %247
        %v249 = vlog2.pop %v248
        %v250 = vmul.f32 %v249, 0.6931472
        %v251 = vmax.f32 %v235, %v236
        %252 = vmax.xlane.f32.xlu0 %v251
        %v253 = vpop.xlane.xlu0 %252
        %v254 = vsub.f32 %v235, %v253
        %v255 = vsub.f32 %v236, %v253
        %v256 = vmul.f32 %v254, 1.442695
        %v257 = vpow.pop %v256
        %v258 = vmul.f32 %v255, 1.442695
        %v259 = vpow.pop %v258
        %v260 = vadd.f32 %v257, %v259
        %261 = vadd.xlane.f32.xlu0 %v260
        %v262 = vpop.xlane.xlu0 %261
        %v263 = vsub.f32 %v254, %v240
        %v264 = vsub.f32 %v255, %v241
        %v265 = vmul.f32 %v257, %v263
        %v266 = vmul.f32 %v259, %v264
        %v267 = vadd.f32 %v265, %v266
        %268 = vadd.xlane.f32.xlu0 %v267
        %v269 = vpop.xlane.xlu0 %268
        %v270 = vrcp.pop %v262
        %v271 = vmul.f32 %v269, %v270
        %v272 = vadd.f32 %v271, %v250
        %v273 = vlog2.pop %v262
        %v274 = vmul.f32 %v273, 0.6931472
        %v275 = vsub.f32 %v272, %v274
        %vm276 = vcmask 7168
        %v277 = vsel %vm276, %v275, 0.0
        %278 = vadd.xlane.f32.xlu0 %v277
        %v279 = vpop.xlane.xlu0 %278
        %v280 = vrot.slane %v279, 4
        %v281 = vadd.f32 %v279, %v280
        %v282 = vrot.slane %v281, 2
        %v283 = vadd.f32 %v281, %v282
        %v284 = vrot.slane %v283, 1
        %v285 = vadd.f32 %v283, %v284
        %s286 = vtos %v285
        %v287 = vstv %s286
        %288 = vst [vmem:[%s225] sm:$0xff] %v287
        %s289 = sand.u32 %s105, 1
        %s290 = scalar_lea.sflag [#allocation5], %s289
        %s291 = sand.u32 %s105, 1
        %s292 = smul.addr %s291, 8
        %s293 = scalar_lea.vmem [#allocation8], %s292
        // Predicated region
        $region41: #{tpu_custom_call.1} parent=31 // pred_check
          %p294 = pneg %p115
        $region42: #{tpu_custom_call.1} parent=31 // pred_check_branch
          %296 = sbr.rel (%p294) target = $region44
        $region43: #{tpu_custom_call.1} parent=31 // pred_region
          %s298 = ssub.s32 128, 128
          %299 = vsyncadd %s290, %s298
          %s300 = smul.addr %s24, 128
          %s301 = scalar_lea.hbm %s3, %s300
          %s303 = sshll.u32 %s293, 4
          %s304 = int_to_ptr.vmem [resolvable:$true] %s303
          %306 = dma.vmem_to_hbm [thread:$0]  %s304, 128, %s301, %s290
        $region44: #{tpu_custom_call.1} parent=31 // pred_fallthru
          _
      $region32: #{tpu_custom_call.1} parent=5 // pred_fallthru
        _
      %p307 = scmp.le.s32.totalorder 2, %s19
      // Predicated region
      $region45: #{tpu_custom_call.1} parent=5 // pred_check
        %p308 = pneg %p307
      $region46: #{tpu_custom_call.1} parent=5 // pred_check_branch
        %310 = sbr.rel (%p308) target = $region48
      $region47: #{tpu_custom_call.1} parent=5 // pred_region
        %s311 = ssub.s32 %s19, 2
        // Predicated region
        $region49: #{tpu_custom_call.1} parent=47 // pred_check
          %p312 = pneg %p121
        $region50: #{tpu_custom_call.1} parent=47 // pred_check_branch
          %314 = sbr.rel (%p312) target = $region52
        $region51: #{tpu_custom_call.1} parent=47 // pred_region
          %s315 = sand.u32 %s106, 1
          %s316 = scalar_lea.sflag [#allocation5], %s315
          %s317 = sand.u32 %s106, 1
          %s318 = smul.addr %s317, 8
          %s319 = scalar_lea.vmem [#allocation8], %s318
          %320 = dma.done %s316, 128
        $region52: #{tpu_custom_call.1} parent=47 // pred_fallthru
          _
      $region48: #{tpu_custom_call.1} parent=5 // pred_fallthru
        _
    $region6: #{tpu_custom_call.1} parent=1 // loop_footer
      %s23 = sadd.s32 1, %s19
    $region7: #{tpu_custom_call.1} parent=1 // loop_footer_branch
      %18 = sbr.rel target = $region3
    $region8: #{tpu_custom_call.1} parent=1 // loop_exit
      _
    %321 = vsyncpa [#allocation4], 1
    %s322 = scalar_lea.sflag [#allocation4], 1
    %323 = vsyncpa %s322, 1
    %324 = vsyncpa [#allocation7], 1
    %s325 = scalar_lea.sflag [#allocation7], 1
    %326 = vsyncpa %s325, 1
    %327 = vsyncpa [#allocation5], 1
    %s328 = scalar_lea.sflag [#allocation5], 1
    %329 = vsyncpa %s328, 1

</llo_original>
